<compile_context>
chip_gen: v7x
topology: tpu7x:2x2x1
jax: 0.10.0
libtpu: 0.0.40
codegen_flags: <defaults>
</compile_context>

<pallas_src>
import jax
import jax.numpy as jnp
from jax.experimental import pallas as pl
from jax.experimental.pallas import tpu as pltpu

HIDDEN = 1024


def _round_up(x, m):
    return (x + m - 1) // m * m


def mlp_kernel(x_ref, w1_ref, b1_ref, w2_ref, b2_ref, o_ref, h_acc):
    k = pl.program_id(1)

    @pl.when(k == 0)
    def _init():
        h_acc[...] = jnp.zeros_like(h_acc)

    # Layer-1 partial product for this K tile, accumulated in f32.
    h_acc[...] += jnp.dot(x_ref[...], w1_ref[...],
                          preferred_element_type=jnp.float32)

    @pl.when(k == pl.num_programs(1) - 1)
    def _finalize():
        # Bias + ReLU epilogue once per output tile (not per K step).
        h = jnp.maximum(h_acc[...] + b1_ref[...], 0.0)
        # Layer 2 (operands cast to the streaming dtype, f32 accumulation).
        y = jnp.dot(h.astype(w2_ref.dtype), w2_ref[...],
                    preferred_element_type=jnp.float32)
        o_ref[...] = (y + b2_ref[...]).astype(o_ref.dtype)


def mlp_forward(x, w1, b1, w2, b2, *, tile_b=256, tile_k=512,
                compute_dtype=None):
    """x: (B, in_dim); w1: (in_dim, 1024); b1: (1024,) or (1,1024);
    w2: (1024, out_dim); b2: (out_dim,) or (1,out_dim) -> (B, out_dim).
    Matches PyTorch nn.Linear semantics with weights stored pre-transposed."""
    B, in_dim = x.shape
    out_dim = w2.shape[1]
    out_dtype = x.dtype
    cdt = compute_dtype if compute_dtype is not None else x.dtype

    # --- Padding / tile selection (lane-dense, MXU-aligned) ---
    tile_b = min(tile_b, _round_up(B, 8))
    b_pad = _round_up(B, tile_b)
    k_pad = _round_up(in_dim, 128)
    tile_k = min(tile_k, k_pad)
    k_pad = _round_up(k_pad, tile_k)
    n_pad = _round_up(out_dim, 128)

    xp = jnp.zeros((b_pad, k_pad), cdt).at[:B, :in_dim].set(x.astype(cdt))
    w1p = jnp.zeros((k_pad, HIDDEN), cdt).at[:in_dim, :].set(w1.astype(cdt))
    b1p = jnp.reshape(b1, (1, HIDDEN)).astype(jnp.float32)
    w2p = jnp.zeros((HIDDEN, n_pad), cdt).at[:, :out_dim].set(w2.astype(cdt))
    b2p = jnp.zeros((1, n_pad), jnp.float32).at[:, :out_dim].set(
        jnp.reshape(b2, (1, out_dim)).astype(jnp.float32))

    grid = (b_pad // tile_b, k_pad // tile_k)

    # VMEM budget from the actual footprint (double-buffered tiles + scratch).
    dsz = jnp.dtype(cdt).itemsize
    osz = jnp.dtype(out_dtype).itemsize
    vmem_needed = 2 * (tile_b * tile_k * dsz      # x tile
                       + tile_k * HIDDEN * dsz    # w1 tile
                       + HIDDEN * n_pad * dsz     # w2 (resident)
                       + tile_b * n_pad * osz     # out tile
                       + (HIDDEN + n_pad) * 4)    # biases
    vmem_needed += tile_b * HIDDEN * 4            # f32 accumulator scratch
    vmem_limit = int(min(max(vmem_needed * 1.25, 16 << 20), 48 << 20))

    out = pl.pallas_call(
        mlp_kernel,
        out_shape=jax.ShapeDtypeStruct((b_pad, n_pad), out_dtype),
        grid=grid,
        in_specs=[
            pl.BlockSpec((tile_b, tile_k), lambda i, k: (i, k)),   # x
            pl.BlockSpec((tile_k, HIDDEN), lambda i, k: (k, 0)),   # w1
            pl.BlockSpec((1, HIDDEN), lambda i, k: (0, 0)),        # b1 (resident)
            pl.BlockSpec((HIDDEN, n_pad), lambda i, k: (0, 0)),    # w2 (resident)
            pl.BlockSpec((1, n_pad), lambda i, k: (0, 0)),         # b2 (resident)
        ],
        out_specs=pl.BlockSpec((tile_b, n_pad), lambda i, k: (i, 0)),
        scratch_shapes=[pltpu.VMEM((tile_b, HIDDEN), jnp.float32)],
        compiler_params=pltpu.CompilerParams(
            dimension_semantics=("parallel", "arbitrary"),
            vmem_limit_bytes=vmem_limit,
        ),
    )(xp, w1p, b1p, w2p, b2p)

    return out[:B, :out_dim]


def init_params(key, in_dim, out_dim, dtype=jnp.float32):
    """Deterministic init mimicking nn.Linear default (uniform +-1/sqrt(fan_in))."""
    k1, k2, k3, k4 = jax.random.split(key, 4)
    bound1 = 1.0 / jnp.sqrt(in_dim)
    bound2 = 1.0 / jnp.sqrt(HIDDEN)
    w1 = jax.random.uniform(k1, (in_dim, HIDDEN), dtype, -bound1, bound1)
    b1 = jax.random.uniform(k2, (1, HIDDEN), dtype, -bound1, bound1)
    w2 = jax.random.uniform(k3, (HIDDEN, out_dim), dtype, -bound2, bound2)
    b2 = jax.random.uniform(k4, (1, out_dim), dtype, -bound2, bound2)
    return w1, b1, w2, b2


if __name__ == "__main__":
    key = jax.random.PRNGKey(0)
    k_x, k_p = jax.random.split(key)

    B, in_dim, out_dim = 8, 32, 16
    x = jax.random.normal(k_x, (B, in_dim), jnp.float32)
    w1, b1, w2, b2 = init_params(k_p, in_dim, out_dim)

    # --- f32 path (matches PyTorch forward exactly) ---
    out = mlp_forward(x, w1, b1, w2, b2)
    jax.block_until_ready(out)
    ref = jnp.maximum(x @ w1 + b1, 0.0) @ w2 + b2
    assert out.shape == (B, out_dim)
    assert jnp.allclose(out, ref, atol=1e-4, rtol=1e-4)

    # --- bf16 streaming path (f32 accumulation) for v6e/v7x throughput ---
    out_bf = mlp_forward(x, w1, b1, w2, b2, compute_dtype=jnp.bfloat16)
    jax.block_until_ready(out_bf)
    xb = x.astype(jnp.bfloat16)
    w1b, w2b = w1.astype(jnp.bfloat16), w2.astype(jnp.bfloat16)
    h_ref = jnp.maximum(
        jnp.dot(xb, w1b, preferred_element_type=jnp.float32) + b1, 0.0)
    ref_bf = jnp.dot(h_ref.astype(jnp.bfloat16), w2b,
                     preferred_element_type=jnp.float32) + b2
    assert jnp.allclose(out_bf, ref_bf, atol=1e-2, rtol=1e-2)

    print("KERNEL_OK")
</pallas_src>

<mosaic_0001>
module attributes {stable_mosaic.version = 11 : i64} {
  func.func @mlp_kernel(%arg0: i32, %arg1: i32, %arg2: memref<8x128xf32, #tpu.memory_space<vmem>>, %arg3: memref<128x1024xf32, #tpu.memory_space<vmem>>, %arg4: memref<1x1024xf32, #tpu.memory_space<vmem>>, %arg5: memref<1024x128xf32, #tpu.memory_space<vmem>>, %arg6: memref<1x128xf32, #tpu.memory_space<vmem>>, %arg7: memref<8x128xf32, #tpu.memory_space<vmem>>, %arg8: memref<8x1024xf32, #tpu.memory_space<vmem>>) attributes {dimension_semantics = [#tpu.dimension_semantics<parallel>, #tpu.dimension_semantics<arbitrary>], iteration_bounds = array<i64: 1, 1>, scalar_prefetch = 0 : i64, scratch_operands = 1 : i64, tpu.core_type = #tpu.core_type<tc>, window_params = [{transform_indices = @transform_0, window_bounds = array<i64: 8, 128>}, {transform_indices = @transform_1, window_bounds = array<i64: 128, 1024>}, {pipeline_mode = #tpu.pipeline_mode<synchronous>, transform_indices = @transform_2, window_bounds = array<i64: 1, 1024>}, {pipeline_mode = #tpu.pipeline_mode<synchronous>, transform_indices = @transform_3, window_bounds = array<i64: 1024, 128>}, {pipeline_mode = #tpu.pipeline_mode<synchronous>, transform_indices = @transform_4, window_bounds = array<i64: 1, 128>}, {transform_indices = @transform_5, window_bounds = array<i64: 8, 128>}]} {
    %c0_i32 = arith.constant 0 : i32
    %0 = arith.cmpi eq, %arg1, %c0_i32 : i32
    %1 = arith.extui %0 : i1 to i32
    %c0_i32_0 = arith.constant 0 : i32
    %2 = arith.cmpi ne, %1, %c0_i32_0 : i32
    scf.if %2 {
      %cst_10 = arith.constant 0.000000e+00 : f32
      %12 = vector.broadcast %cst_10 : f32 to vector<8x1024xf32>
      %c0_11 = arith.constant 0 : index
      %c0_12 = arith.constant 0 : index
      %13 = vector.load %arg8[%c0_11, %c0_12] : memref<8x1024xf32, #tpu.memory_space<vmem>>, vector<8x1024xf32>
      tpu.vector_store %arg8[%c0_11, %c0_12], %12 {strides = array<i32>} : memref<8x1024xf32, #tpu.memory_space<vmem>>, vector<8x1024xf32>,
    } else {
    }
    %c0 = arith.constant 0 : index
    %c0_1 = arith.constant 0 : index
    %3 = vector.load %arg8[%c0, %c0_1] : memref<8x1024xf32, #tpu.memory_space<vmem>>, vector<8x1024xf32>
    %c0_2 = arith.constant 0 : index
    %c0_3 = arith.constant 0 : index
    %4 = vector.load %arg2[%c0_2, %c0_3] : memref<8x128xf32, #tpu.memory_space<vmem>>, vector<8x128xf32>
    %c0_4 = arith.constant 0 : index
    %c0_5 = arith.constant 0 : index
    %5 = vector.load %arg3[%c0_4, %c0_5] : memref<128x1024xf32, #tpu.memory_space<vmem>>, vector<128x1024xf32>
    %cst = arith.constant dense<0.000000e+00> : vector<8x1024xf32>
    %6 = tpu.matmul %4, %5, %cst {dimension_numbers = #tpu.dot_dimension_numbers<[1], [0], [0], [1], [0, 0, 1, 1], [], []>} : vector<8x128xf32>, vector<128x1024xf32>, vector<8x1024xf32> -> vector<8x1024xf32>
    %7 = arith.addf %3, %6 : vector<8x1024xf32>
    %c0_6 = arith.constant 0 : index
    %c0_7 = arith.constant 0 : index
    %8 = vector.load %arg8[%c0_6, %c0_7] : memref<8x1024xf32, #tpu.memory_space<vmem>>, vector<8x1024xf32>
    tpu.vector_store %arg8[%c0_6, %c0_7], %7 {strides = array<i32>} : memref<8x1024xf32, #tpu.memory_space<vmem>>, vector<8x1024xf32>,
    %c0_i32_8 = arith.constant 0 : i32
    %9 = arith.cmpi eq, %arg1, %c0_i32_8 : i32
    %10 = arith.extui %9 : i1 to i32
    %c0_i32_9 = arith.constant 0 : i32
    %11 = arith.cmpi ne, %10, %c0_i32_9 : i32
    scf.if %11 {
      %c0_10 = arith.constant 0 : index
      %c0_11 = arith.constant 0 : index
      %12 = vector.load %arg8[%c0_10, %c0_11] : memref<8x1024xf32, #tpu.memory_space<vmem>>, vector<8x1024xf32>
      %c0_12 = arith.constant 0 : index
      %c0_13 = arith.constant 0 : index
      %13 = vector.load %arg4[%c0_12, %c0_13] : memref<1x1024xf32, #tpu.memory_space<vmem>>, vector<1x1024xf32>
      %14 = vector.broadcast %13 : vector<1x1024xf32> to vector<8x1024xf32>
      %15 = arith.addf %12, %14 : vector<8x1024xf32>
      %cst_14 = arith.constant 0.000000e+00 : f32
      %16 = vector.broadcast %cst_14 : f32 to vector<8x1024xf32>
      %17 = arith.maximumf %15, %16 : vector<8x1024xf32>
      %c0_15 = arith.constant 0 : index
      %c0_16 = arith.constant 0 : index
      %18 = vector.load %arg5[%c0_15, %c0_16] : memref<1024x128xf32, #tpu.memory_space<vmem>>, vector<1024x128xf32>
      %cst_17 = arith.constant dense<0.000000e+00> : vector<8x128xf32>
      %19 = tpu.matmul %17, %18, %cst_17 {dimension_numbers = #tpu.dot_dimension_numbers<[1], [0], [0], [1], [0, 0, 1, 1], [], []>} : vector<8x1024xf32>, vector<1024x128xf32>, vector<8x128xf32> -> vector<8x128xf32>
      %c0_18 = arith.constant 0 : index
      %c0_19 = arith.constant 0 : index
      %20 = vector.load %arg6[%c0_18, %c0_19] : memref<1x128xf32, #tpu.memory_space<vmem>>, vector<1x128xf32>
      %21 = vector.broadcast %20 : vector<1x128xf32> to vector<8x128xf32>
      %22 = arith.addf %19, %21 : vector<8x128xf32>
      %c0_20 = arith.constant 0 : index
      %c0_21 = arith.constant 0 : index
      %23 = vector.load %arg7[%c0_20, %c0_21] : memref<8x128xf32, #tpu.memory_space<vmem>>, vector<8x128xf32>
      tpu.vector_store %arg7[%c0_20, %c0_21], %22 {strides = array<i32>} : memref<8x128xf32, #tpu.memory_space<vmem>>, vector<8x128xf32>,
    } else {
    }
    return
  }
  func.func @transform_0(%arg0: i32, %arg1: i32) -> (i32, i32) {
    %c0_i32 = arith.constant 0 : i32
    return %arg0, %arg1 : i32, i32
  }
  func.func @transform_1(%arg0: i32, %arg1: i32) -> (i32, i32) {
    %c0_i32 = arith.constant 0 : i32
    %c0_i32_0 = arith.constant 0 : i32
    return %arg1, %c0_i32 : i32, i32
  }
  func.func @transform_2(%arg0: i32, %arg1: i32) -> (i32, i32) {
    %c0_i32 = arith.constant 0 : i32
    %c0_i32_0 = arith.constant 0 : i32
    %c0_i32_1 = arith.constant 0 : i32
    return %c0_i32, %c0_i32_0 : i32, i32
  }
  func.func @transform_3(%arg0: i32, %arg1: i32) -> (i32, i32) {
    %c0_i32 = arith.constant 0 : i32
    %c0_i32_0 = arith.constant 0 : i32
    %c0_i32_1 = arith.constant 0 : i32
    return %c0_i32, %c0_i32_0 : i32, i32
  }
  func.func @transform_4(%arg0: i32, %arg1: i32) -> (i32, i32) {
    %c0_i32 = arith.constant 0 : i32
    %c0_i32_0 = arith.constant 0 : i32
    %c0_i32_1 = arith.constant 0 : i32
    return %c0_i32, %c0_i32_0 : i32, i32
  }
  func.func @transform_5(%arg0: i32, %arg1: i32) -> (i32, i32) {
    %c0_i32 = arith.constant 0 : i32
    %c0_i32_0 = arith.constant 0 : i32
    return %arg0, %c0_i32 : i32, i32
  }
}

</mosaic_0001>

<llo_original>
// kernel: tpu_custom_call.1
$region0: #{tpu_custom_call.1}
  #allocation0 [shape = 'u32[]', space=smem, size = 0x4, offset = 0x4, fixed_abs, tag = 'smem constant byte address 0x4 - core index']
  #allocation1 [shape = 'u32[144,128]{1,0:T(1,128)}', space=vmem, size = 0x12000, scoped, tag = 'internal scratch']
  #allocation2 [shape = 'f32[8,1024]{1,0:T(8,128)}', space=vmem, size = 0x8000, scoped, tag = 'scratch operand']
  %s0 = inlined_call_operand.hbm [shape: f32[8,128], index: 0, kind: input, shape index: {}]
  %s1 = inlined_call_operand.hbm [shape: f32[128,1024], index: 1, kind: input, shape index: {}]
  %s2 = inlined_call_operand.hbm [shape: f32[1,1024], index: 2, kind: input, shape index: {}]
  %s3 = inlined_call_operand.hbm [shape: f32[1024,128], index: 3, kind: input, shape index: {}]
  %s4 = inlined_call_operand.vmem [shape: f32[1,128], index: 4, kind: input, shape index: {}]
  %s5 = inlined_call_operand.hbm [shape: f32[8,128], index: 5, kind: output, shape index: {}]
  %s6 = sld [smem:[#allocation0]]
  $region54: #{tpu_custom_call.1} parent=0
    _
  %s8 = ssub.s32 1, %s6
  %s9 = scalar_select 0, %s8, %s6
  $region1: #{tpu_custom_call.1} parent=0
    #allocation3 [shape = 'u8[4096]{0}', space=vmem, size = 0x1000, scoped, tag = 'input window, operand 0, single buffered']
    #allocation4 [shape = 's32[1]{0}', space=sflag, size = 0x4, scoped, tag = 'scoped memory for tpu_custom_call.1']
    #allocation5 [shape = 's32[1]{0}', space=sflag, size = 0x4, scoped, tag = 'scoped memory for tpu_custom_call.1']
    #allocation6 [shape = 'u8[524288]{0}', space=vmem, size = 0x80000, scoped, tag = 'input window, operand 1, single buffered']
    #allocation7 [shape = 's32[1]{0}', space=sflag, size = 0x4, scoped, tag = 'scoped memory for tpu_custom_call.1']
    #allocation8 [shape = 'u8[4096]{0}', space=vmem, size = 0x1000, scoped, tag = 'input window, operand 2, single buffered']
    #allocation9 [shape = 'u8[524288]{0}', space=vmem, size = 0x80000, scoped, tag = 'input window, operand 3, single buffered']
    #allocation10 [shape = 's32[1]{0}', space=sflag, size = 0x4, scoped, tag = 'scoped memory for tpu_custom_call.1']
    #allocation11 [shape = 'u8[4096]{0}', space=vmem, size = 0x1000, scoped, tag = 'output window, operand 0, single buffered']
    %10 = vsyncpa [#allocation4], 0
    %11 = vsyncpa [#allocation7], 0
    %12 = vsyncpa [#allocation10], 0
    %13 = vsyncpa [#allocation5], 0
    // Predicated region
    $region2: #{tpu_custom_call.1} parent=1 // pred_check
      _
    $region3: #{tpu_custom_call.1} parent=1 // pred_check_branch
      %15 = sbr.rel (0) target = $region5
    $region4: #{tpu_custom_call.1} parent=1 // pred_region
      %s17 = ssub.s32 128, 128
      %18 = vsyncadd [#allocation4], %s17
      %s20 = sshll.u32 [#allocation3], 4
      %s21 = int_to_ptr.vmem [resolvable:$true] %s20
      %23 = dma.hbm_to_vmem [thread:$0]  %s0, 128, %s21, [#allocation4]
    $region5: #{tpu_custom_call.1} parent=1 // pred_fallthru
      _
    // Predicated region
    $region6: #{tpu_custom_call.1} parent=1 // pred_check
      _
    $region7: #{tpu_custom_call.1} parent=1 // pred_check_branch
      %25 = sbr.rel (0) target = $region9
    $region8: #{tpu_custom_call.1} parent=1 // pred_region
      %s27 = ssub.s32 16384, 16384
      %28 = vsyncadd [#allocation7], %s27
      %s29 = sshll.u32 [#allocation6], 4
      %s30 = int_to_ptr.vmem [resolvable:$true] %s29
      %35 = dma.hbm_to_vmem [thread:$0]  %s1, 16384, %s30, [#allocation7], 1024, 1024, 64
    $region9: #{tpu_custom_call.1} parent=1 // pred_fallthru
      _
    // Predicated region
    $region10: #{tpu_custom_call.1} parent=1 // pred_check
      _
    $region11: #{tpu_custom_call.1} parent=1 // pred_check_branch
      %37 = sbr.rel (0) target = $region13
    $region12: #{tpu_custom_call.1} parent=1 // pred_region
      %s39 = ssub.s32 128, 128
      %40 = vsyncadd [#allocation7], %s39
      %s42 = sshll.u32 [#allocation8], 4
      %s43 = int_to_ptr.vmem [resolvable:$true] %s42
      %45 = dma.hbm_to_vmem [thread:$0]  %s2, 128, %s43, [#allocation7]
    $region13: #{tpu_custom_call.1} parent=1 // pred_fallthru
      _
    // Predicated region
    $region14: #{tpu_custom_call.1} parent=1 // pred_check
      _
    $region15: #{tpu_custom_call.1} parent=1 // pred_check_branch
      %47 = sbr.rel (0) target = $region17
    $region16: #{tpu_custom_call.1} parent=1 // pred_region
      %s49 = ssub.s32 16384, 16384
      %50 = vsyncadd [#allocation10], %s49
      %s51 = sshll.u32 [#allocation9], 4
      %s52 = int_to_ptr.vmem [resolvable:$true] %s51
      %57 = dma.hbm_to_vmem [thread:$0]  %s3, 16384, %s52, [#allocation10], 128, 128, 8
    $region17: #{tpu_custom_call.1} parent=1 // pred_fallthru
      _
    // Predicated region
    $region18: #{tpu_custom_call.1} parent=1 // pred_check
      _
    $region19: #{tpu_custom_call.1} parent=1 // pred_check_branch
      %59 = sbr.rel (0) target = $region21
    $region20: #{tpu_custom_call.1} parent=1 // pred_region
      _
    $region21: #{tpu_custom_call.1} parent=1 // pred_fallthru
      _
    // Predicated region
    $region22: #{tpu_custom_call.1} parent=1 // pred_check
      _
    $region23: #{tpu_custom_call.1} parent=1 // pred_check_branch
      %61 = sbr.rel (0) target = $region25
    $region24: #{tpu_custom_call.1} parent=1 // pred_region
      %62 = dma.done [#allocation4], 128
    $region25: #{tpu_custom_call.1} parent=1 // pred_fallthru
      _
    // Predicated region
    $region26: #{tpu_custom_call.1} parent=1 // pred_check
      _
    $region27: #{tpu_custom_call.1} parent=1 // pred_check_branch
      %64 = sbr.rel (0) target = $region29
    $region28: #{tpu_custom_call.1} parent=1 // pred_region
      %65 = dma.done [#allocation7], 16384
    $region29: #{tpu_custom_call.1} parent=1 // pred_fallthru
      _
    // Predicated region
    $region30: #{tpu_custom_call.1} parent=1 // pred_check
      _
    $region31: #{tpu_custom_call.1} parent=1 // pred_check_branch
      %67 = sbr.rel (0) target = $region33
    $region32: #{tpu_custom_call.1} parent=1 // pred_region
      %68 = dma.done [#allocation7], 128
    $region33: #{tpu_custom_call.1} parent=1 // pred_fallthru
      _
    // Predicated region
    $region34: #{tpu_custom_call.1} parent=1 // pred_check
      _
    $region35: #{tpu_custom_call.1} parent=1 // pred_check_branch
      %70 = sbr.rel (0) target = $region37
    $region36: #{tpu_custom_call.1} parent=1 // pred_region
      %71 = dma.done [#allocation10], 16384
    $region37: #{tpu_custom_call.1} parent=1 // pred_fallthru
      _
    %p72 = scmp.eq.s32.totalorder 0, 0
    // Predicated region
    $region38: #{tpu_custom_call.1} parent=1 // pred_check
      %p73 = pneg %p72
    $region39: #{tpu_custom_call.1} parent=1 // pred_check_branch
      %75 = sbr.rel (%p73) target = $region41
    $region40: #{tpu_custom_call.1} parent=1 // pred_region
      %76 = vst [vmem:[#allocation2] sm:$0xff] 0.0
      %77 = vst [vmem:[#allocation2 + $0x8] sm:$0xff] 0.0
      %78 = vst [vmem:[#allocation2 + $0x10] sm:$0xff] 0.0
      %79 = vst [vmem:[#allocation2 + $0x18] sm:$0xff] 0.0
      %80 = vst [vmem:[#allocation2 + $0x20] sm:$0xff] 0.0
      %81 = vst [vmem:[#allocation2 + $0x28] sm:$0xff] 0.0
      %82 = vst [vmem:[#allocation2 + $0x30] sm:$0xff] 0.0
      %83 = vst [vmem:[#allocation2 + $0x38] sm:$0xff] 0.0
    $region41: #{tpu_custom_call.1} parent=1 // pred_fallthru
      _
    %v84 = vld [vmem:[#allocation2] sm:$0xff]
    %v85 = vld [vmem:[#allocation2 + $0x8] sm:$0xff]
    %v86 = vld [vmem:[#allocation2 + $0x10] sm:$0xff]
    %v87 = vld [vmem:[#allocation2 + $0x18] sm:$0xff]
    %v88 = vld [vmem:[#allocation2 + $0x20] sm:$0xff]
    %v89 = vld [vmem:[#allocation2 + $0x28] sm:$0xff]
    %v90 = vld [vmem:[#allocation2 + $0x30] sm:$0xff]
    %v91 = vld [vmem:[#allocation2 + $0x38] sm:$0xff]
    %v92 = vld [vmem:[#allocation3] sm:$0xff]
    %v93 = vld [vmem:[#allocation6] sm:$0xff]
    %v94 = vld [vmem:[#allocation6 + $0x8] sm:$0xff]
    %v95 = vld [vmem:[#allocation6 + $0x10] sm:$0xff]
    %v96 = vld [vmem:[#allocation6 + $0x18] sm:$0xff]
    %v97 = vld [vmem:[#allocation6 + $0x20] sm:$0xff]
    %v98 = vld [vmem:[#allocation6 + $0x28] sm:$0xff]
    %v99 = vld [vmem:[#allocation6 + $0x30] sm:$0xff]
    %v100 = vld [vmem:[#allocation6 + $0x38] sm:$0xff]
    %v101 = vld [vmem:[#allocation6 + $0x40] sm:$0xff]
    %v102 = vld [vmem:[#allocation6 + $0x48] sm:$0xff]
    %v103 = vld [vmem:[#allocation6 + $0x50] sm:$0xff]
    %v104 = vld [vmem:[#allocation6 + $0x58] sm:$0xff]
    %v105 = vld [vmem:[#allocation6 + $0x60] sm:$0xff]
    %v106 = vld [vmem:[#allocation6 + $0x68] sm:$0xff]
    %v107 = vld [vmem:[#allocation6 + $0x70] sm:$0xff]
    %v108 = vld [vmem:[#allocation6 + $0x78] sm:$0xff]
    %v109 = vld [vmem:[#allocation6 + $0x80] sm:$0xff]
    %v110 = vld [vmem:[#allocation6 + $0x88] sm:$0xff]
    %v111 = vld [vmem:[#allocation6 + $0x90] sm:$0xff]
    %v112 = vld [vmem:[#allocation6 + $0x98] sm:$0xff]
    %v113 = vld [vmem:[#allocation6 + $0xa0] sm:$0xff]
    %v114 = vld [vmem:[#allocation6 + $0xa8] sm:$0xff]
    %v115 = vld [vmem:[#allocation6 + $0xb0] sm:$0xff]
    %v116 = vld [vmem:[#allocation6 + $0xb8] sm:$0xff]
    %v117 = vld [vmem:[#allocation6 + $0xc0] sm:$0xff]
    %v118 = vld [vmem:[#allocation6 + $0xc8] sm:$0xff]
    %v119 = vld [vmem:[#allocation6 + $0xd0] sm:$0xff]
    %v120 = vld [vmem:[#allocation6 + $0xd8] sm:$0xff]
    %v121 = vld [vmem:[#allocation6 + $0xe0] sm:$0xff]
    %v122 = vld [vmem:[#allocation6 + $0xe8] sm:$0xff]
    %v123 = vld [vmem:[#allocation6 + $0xf0] sm:$0xff]
    %v124 = vld [vmem:[#allocation6 + $0xf8] sm:$0xff]
    %v125 = vld [vmem:[#allocation6 + $0x100] sm:$0xff]
    %v126 = vld [vmem:[#allocation6 + $0x108] sm:$0xff]
    %v127 = vld [vmem:[#allocation6 + $0x110] sm:$0xff]
    %v128 = vld [vmem:[#allocation6 + $0x118] sm:$0xff]
    %v129 = vld [vmem:[#allocation6 + $0x120] sm:$0xff]
    %v130 = vld [vmem:[#allocation6 + $0x128] sm:$0xff]
    %v131 = vld [vmem:[#allocation6 + $0x130] sm:$0xff]
    %v132 = vld [vmem:[#allocation6 + $0x138] sm:$0xff]
    %v133 = vld [vmem:[#allocation6 + $0x140] sm:$0xff]
    %v134 = vld [vmem:[#allocation6 + $0x148] sm:$0xff]
    %v135 = vld [vmem:[#allocation6 + $0x150] sm:$0xff]
    %v136 = vld [vmem:[#allocation6 + $0x158] sm:$0xff]
    %v137 = vld [vmem:[#allocation6 + $0x160] sm:$0xff]
    %v138 = vld [vmem:[#allocation6 + $0x168] sm:$0xff]
    %v139 = vld [vmem:[#allocation6 + $0x170] sm:$0xff]
    %v140 = vld [vmem:[#allocation6 + $0x178] sm:$0xff]
    %v141 = vld [vmem:[#allocation6 + $0x180] sm:$0xff]
    %v142 = vld [vmem:[#allocation6 + $0x188] sm:$0xff]
    %v143 = vld [vmem:[#allocation6 + $0x190] sm:$0xff]
    %v144 = vld [vmem:[#allocation6 + $0x198] sm:$0xff]
    %v145 = vld [vmem:[#allocation6 + $0x1a0] sm:$0xff]
    %v146 = vld [vmem:[#allocation6 + $0x1a8] sm:$0xff]
    %v147 = vld [vmem:[#allocation6 + $0x1b0] sm:$0xff]
    %v148 = vld [vmem:[#allocation6 + $0x1b8] sm:$0xff]
    %v149 = vld [vmem:[#allocation6 + $0x1c0] sm:$0xff]
    %v150 = vld [vmem:[#allocation6 + $0x1c8] sm:$0xff]
    %v151 = vld [vmem:[#allocation6 + $0x1d0] sm:$0xff]
    %v152 = vld [vmem:[#allocation6 + $0x1d8] sm:$0xff]
    %v153 = vld [vmem:[#allocation6 + $0x1e0] sm:$0xff]
    %v154 = vld [vmem:[#allocation6 + $0x1e8] sm:$0xff]
    %v155 = vld [vmem:[#allocation6 + $0x1f0] sm:$0xff]
    %v156 = vld [vmem:[#allocation6 + $0x1f8] sm:$0xff]
    %v157 = vld [vmem:[#allocation6 + $0x200] sm:$0xff]
    %v158 = vld [vmem:[#allocation6 + $0x208] sm:$0xff]
    %v159 = vld [vmem:[#allocation6 + $0x210] sm:$0xff]
    %v160 = vld [vmem:[#allocation6 + $0x218] sm:$0xff]
    %v161 = vld [vmem:[#allocation6 + $0x220] sm:$0xff]
    %v162 = vld [vmem:[#allocation6 + $0x228] sm:$0xff]
    %v163 = vld [vmem:[#allocation6 + $0x230] sm:$0xff]
    %v164 = vld [vmem:[#allocation6 + $0x238] sm:$0xff]
    %v165 = vld [vmem:[#allocation6 + $0x240] sm:$0xff]
    %v166 = vld [vmem:[#allocation6 + $0x248] sm:$0xff]
    %v167 = vld [vmem:[#allocation6 + $0x250] sm:$0xff]
    %v168 = vld [vmem:[#allocation6 + $0x258] sm:$0xff]
    %v169 = vld [vmem:[#allocation6 + $0x260] sm:$0xff]
    %v170 = vld [vmem:[#allocation6 + $0x268] sm:$0xff]
    %v171 = vld [vmem:[#allocation6 + $0x270] sm:$0xff]
    %v172 = vld [vmem:[#allocation6 + $0x278] sm:$0xff]
    %v173 = vld [vmem:[#allocation6 + $0x280] sm:$0xff]
    %v174 = vld [vmem:[#allocation6 + $0x288] sm:$0xff]
    %v175 = vld [vmem:[#allocation6 + $0x290] sm:$0xff]
    %v176 = vld [vmem:[#allocation6 + $0x298] sm:$0xff]
    %v177 = vld [vmem:[#allocation6 + $0x2a0] sm:$0xff]
    %v178 = vld [vmem:[#allocation6 + $0x2a8] sm:$0xff]
    %v179 = vld [vmem:[#allocation6 + $0x2b0] sm:$0xff]
    %v180 = vld [vmem:[#allocation6 + $0x2b8] sm:$0xff]
    %v181 = vld [vmem:[#allocation6 + $0x2c0] sm:$0xff]
    %v182 = vld [vmem:[#allocation6 + $0x2c8] sm:$0xff]
    %v183 = vld [vmem:[#allocation6 + $0x2d0] sm:$0xff]
    %v184 = vld [vmem:[#allocation6 + $0x2d8] sm:$0xff]
    %v185 = vld [vmem:[#allocation6 + $0x2e0] sm:$0xff]
    %v186 = vld [vmem:[#allocation6 + $0x2e8] sm:$0xff]
    %v187 = vld [vmem:[#allocation6 + $0x2f0] sm:$0xff]
    %v188 = vld [vmem:[#allocation6 + $0x2f8] sm:$0xff]
    %v189 = vld [vmem:[#allocation6 + $0x300] sm:$0xff]
    %v190 = vld [vmem:[#allocation6 + $0x308] sm:$0xff]
    %v191 = vld [vmem:[#allocation6 + $0x310] sm:$0xff]
    %v192 = vld [vmem:[#allocation6 + $0x318] sm:$0xff]
    %v193 = vld [vmem:[#allocation6 + $0x320] sm:$0xff]
    %v194 = vld [vmem:[#allocation6 + $0x328] sm:$0xff]
    %v195 = vld [vmem:[#allocation6 + $0x330] sm:$0xff]
    %v196 = vld [vmem:[#allocation6 + $0x338] sm:$0xff]
    %v197 = vld [vmem:[#allocation6 + $0x340] sm:$0xff]
    %v198 = vld [vmem:[#allocation6 + $0x348] sm:$0xff]
    %v199 = vld [vmem:[#allocation6 + $0x350] sm:$0xff]
    %v200 = vld [vmem:[#allocation6 + $0x358] sm:$0xff]
    %v201 = vld [vmem:[#allocation6 + $0x360] sm:$0xff]
    %v202 = vld [vmem:[#allocation6 + $0x368] sm:$0xff]
    %v203 = vld [vmem:[#allocation6 + $0x370] sm:$0xff]
    %v204 = vld [vmem:[#allocation6 + $0x378] sm:$0xff]
    %v205 = vld [vmem:[#allocation6 + $0x380] sm:$0xff]
    %v206 = vld [vmem:[#allocation6 + $0x388] sm:$0xff]
    %v207 = vld [vmem:[#allocation6 + $0x390] sm:$0xff]
    %v208 = vld [vmem:[#allocation6 + $0x398] sm:$0xff]
    %v209 = vld [vmem:[#allocation6 + $0x3a0] sm:$0xff]
    %v210 = vld [vmem:[#allocation6 + $0x3a8] sm:$0xff]
    %v211 = vld [vmem:[#allocation6 + $0x3b0] sm:$0xff]
    %v212 = vld [vmem:[#allocation6 + $0x3b8] sm:$0xff]
    %v213 = vld [vmem:[#allocation6 + $0x3c0] sm:$0xff]
    %v214 = vld [vmem:[#allocation6 + $0x3c8] sm:$0xff]
    %v215 = vld [vmem:[#allocation6 + $0x3d0] sm:$0xff]
    %v216 = vld [vmem:[#allocation6 + $0x3d8] sm:$0xff]
    %v217 = vld [vmem:[#allocation6 + $0x3e0] sm:$0xff]
    %v218 = vld [vmem:[#allocation6 + $0x3e8] sm:$0xff]
    %v219 = vld [vmem:[#allocation6 + $0x3f0] sm:$0xff]
    %v220 = vld [vmem:[#allocation6 + $0x3f8] sm:$0xff]
    %221 = vmatprep.subr.mxu0 %v94
    %222 = vmatpush1.msra.mxu0 %v93
    %223 = vmatprep.subr.mxu0 %v102
    %224 = vmatpush1.msra.mxu0 %v101
    %225 = vmatprep.subr.mxu0 %v110
    %226 = vmatpush1.msra.mxu0 %v109
    %227 = vmatprep.subr.mxu0 %v118
    %228 = vmatpush1.msra.mxu0 %v117
    %229 = vmatprep.subr.mxu0 %v126
    %230 = vmatpush1.msra.mxu0 %v125
    %231 = vmatprep.subr.mxu0 %v134
    %232 = vmatpush1.msra.mxu0 %v133
    %233 = vmatprep.subr.mxu0 %v142
    %234 = vmatpush1.msra.mxu0 %v141
    %235 = vmatprep.subr.mxu0 %v150
    %236 = vmatpush1.msra.mxu0 %v149
    %237 = vmatprep.subr.mxu0 %v158
    %238 = vmatpush1.msra.mxu0 %v157
    %239 = vmatprep.subr.mxu0 %v166
    %240 = vmatpush1.msra.mxu0 %v165
    %241 = vmatprep.subr.mxu0 %v174
    %242 = vmatpush1.msra.mxu0 %v173
    %243 = vmatprep.subr.mxu0 %v182
    %244 = vmatpush1.msra.mxu0 %v181
    %245 = vmatprep.subr.mxu0 %v190
    %246 = vmatpush1.msra.mxu0 %v189
    %247 = vmatprep.subr.mxu0 %v198
    %248 = vmatpush1.msra.mxu0 %v197
    %249 = vmatprep.subr.mxu0 %v206
    %250 = vmatpush1.msra.mxu0 %v205
    %251 = vmatprep.subr.mxu0 %v214
    %252 = vmatpush1.msra.mxu0 %v213
    %253 = vmatprep.subr.mxu0 0.0
    %254 = vmatpush1.msra.mxu0 0.0
    %255 = vmatprep.subr.mxu0 0.0
    %256 = vmatpush1.msra.mxu0 0.0
    %257 = vmatprep.subr.mxu0 0.0
    %258 = vmatpush1.msra.mxu0 0.0
    %259 = vmatprep.subr.mxu0 0.0
    %260 = vmatpush1.msra.mxu0 0.0
    %261 = vmatprep.subr.mxu0 0.0
    %262 = vmatpush1.msra.mxu0 0.0
    %263 = vmatprep.subr.mxu0 0.0
    %264 = vmatpush1.msra.mxu0 0.0
    %265 = vmatprep.subr.mxu0 0.0
    %266 = vmatpush1.msra.mxu0 0.0
    %267 = vmatprep.subr.mxu0 0.0
    %268 = vmatpush1.msra.mxu0 0.0
    %269 = vmatprep.subr.mxu0 0.0
    %270 = vmatpush1.msra.mxu0 0.0
    %271 = vmatprep.subr.mxu0 0.0
    %272 = vmatpush1.msra.mxu0 0.0
    %273 = vmatprep.subr.mxu0 0.0
    %274 = vmatpush1.msra.mxu0 0.0
    %275 = vmatprep.subr.mxu0 0.0
    %276 = vmatpush1.msra.mxu0 0.0
    %277 = vmatprep.subr.mxu0 0.0
    %278 = vmatpush1.msra.mxu0 0.0
    %279 = vmatprep.subr.mxu0 0.0
    %280 = vmatpush1.msra.mxu0 0.0
    %281 = vmatprep.subr.mxu0 0.0
    %282 = vmatpush1.msra.mxu0 0.0
    %283 = vmatprep.subr.mxu0 0.0
    %284 = vmatpush1.msra.mxu0 0.0
    %285 = vmatprep.mubr.f32.mxu0 0.0
    %286 = vmatmul.mubr.f32.gmra.mrb[0].mxu0 %v92
    %v287 = vpop.f32.mrb[0].mxu0
    %v288 = vadd.f32 0.0, %v287
    %v289 = vpop.f32.mrb[0].mxu0
    %v290 = vadd.f32 0.0, %v289
    %291 = vdwg.mxu0
    %292 = vmatprep.subr.mxu0 %v96
    %293 = vmatpush1.msra.mxu0 %v95
    %294 = vmatprep.subr.mxu0 %v104
    %295 = vmatpush1.msra.mxu0 %v103
    %296 = vmatprep.subr.mxu0 %v112
    %297 = vmatpush1.msra.mxu0 %v111
    %298 = vmatprep.subr.mxu0 %v120
    %299 = vmatpush1.msra.mxu0 %v119
    %300 = vmatprep.subr.mxu0 %v128
    %301 = vmatpush1.msra.mxu0 %v127
    %302 = vmatprep.subr.mxu0 %v136
    %303 = vmatpush1.msra.mxu0 %v135
    %304 = vmatprep.subr.mxu0 %v144
    %305 = vmatpush1.msra.mxu0 %v143
    %306 = vmatprep.subr.mxu0 %v152
    %307 = vmatpush1.msra.mxu0 %v151
    %308 = vmatprep.subr.mxu0 %v160
    %309 = vmatpush1.msra.mxu0 %v159
    %310 = vmatprep.subr.mxu0 %v168
    %311 = vmatpush1.msra.mxu0 %v167
    %312 = vmatprep.subr.mxu0 %v176
    %313 = vmatpush1.msra.mxu0 %v175
    %314 = vmatprep.subr.mxu0 %v184
    %315 = vmatpush1.msra.mxu0 %v183
    %316 = vmatprep.subr.mxu0 %v192
    %317 = vmatpush1.msra.mxu0 %v191
    %318 = vmatprep.subr.mxu0 %v200
    %319 = vmatpush1.msra.mxu0 %v199
    %320 = vmatprep.subr.mxu0 %v208
    %321 = vmatpush1.msra.mxu0 %v207
    %322 = vmatprep.subr.mxu0 %v216
    %323 = vmatpush1.msra.mxu0 %v215
    %324 = vmatprep.subr.mxu0 0.0
    %325 = vmatpush1.msra.mxu0 0.0
    %326 = vmatprep.subr.mxu0 0.0
    %327 = vmatpush1.msra.mxu0 0.0
    %328 = vmatprep.subr.mxu0 0.0
    %329 = vmatpush1.msra.mxu0 0.0
    %330 = vmatprep.subr.mxu0 0.0
    %331 = vmatpush1.msra.mxu0 0.0
    %332 = vmatprep.subr.mxu0 0.0
    %333 = vmatpush1.msra.mxu0 0.0
    %334 = vmatprep.subr.mxu0 0.0
    %335 = vmatpush1.msra.mxu0 0.0
    %336 = vmatprep.subr.mxu0 0.0
    %337 = vmatpush1.msra.mxu0 0.0
    %338 = vmatprep.subr.mxu0 0.0
    %339 = vmatpush1.msra.mxu0 0.0
    %340 = vmatprep.subr.mxu0 0.0
    %341 = vmatpush1.msra.mxu0 0.0
    %342 = vmatprep.subr.mxu0 0.0
    %343 = vmatpush1.msra.mxu0 0.0
    %344 = vmatprep.subr.mxu0 0.0
    %345 = vmatpush1.msra.mxu0 0.0
    %346 = vmatprep.subr.mxu0 0.0
    %347 = vmatpush1.msra.mxu0 0.0
    %348 = vmatprep.subr.mxu0 0.0
    %349 = vmatpush1.msra.mxu0 0.0
    %350 = vmatprep.subr.mxu0 0.0
    %351 = vmatpush1.msra.mxu0 0.0
    %352 = vmatprep.subr.mxu0 0.0
    %353 = vmatpush1.msra.mxu0 0.0
    %354 = vmatprep.subr.mxu0 0.0
    %355 = vmatpush1.msra.mxu0 0.0
    %356 = vmatprep.mubr.f32.mxu0 0.0
    %357 = vmatmul.mubr.f32.gmra.mrb[0].mxu0 %v92
    %v358 = vpop.f32.mrb[0].mxu0
    %v359 = vadd.f32 0.0, %v358
    %v360 = vpop.f32.mrb[0].mxu0
    %v361 = vadd.f32 0.0, %v360
    %362 = vdwg.mxu0
    %363 = vmatprep.subr.mxu0 %v98
    %364 = vmatpush1.msra.mxu0 %v97
    %365 = vmatprep.subr.mxu0 %v106
    %366 = vmatpush1.msra.mxu0 %v105
    %367 = vmatprep.subr.mxu0 %v114
    %368 = vmatpush1.msra.mxu0 %v113
    %369 = vmatprep.subr.mxu0 %v122
    %370 = vmatpush1.msra.mxu0 %v121
    %371 = vmatprep.subr.mxu0 %v130
    %372 = vmatpush1.msra.mxu0 %v129
    %373 = vmatprep.subr.mxu0 %v138
    %374 = vmatpush1.msra.mxu0 %v137
    %375 = vmatprep.subr.mxu0 %v146
    %376 = vmatpush1.msra.mxu0 %v145
    %377 = vmatprep.subr.mxu0 %v154
    %378 = vmatpush1.msra.mxu0 %v153
    %379 = vmatprep.subr.mxu0 %v162
    %380 = vmatpush1.msra.mxu0 %v161
    %381 = vmatprep.subr.mxu0 %v170
    %382 = vmatpush1.msra.mxu0 %v169
    %383 = vmatprep.subr.mxu0 %v178
    %384 = vmatpush1.msra.mxu0 %v177
    %385 = vmatprep.subr.mxu0 %v186
    %386 = vmatpush1.msra.mxu0 %v185
    %387 = vmatprep.subr.mxu0 %v194
    %388 = vmatpush1.msra.mxu0 %v193
    %389 = vmatprep.subr.mxu0 %v202
    %390 = vmatpush1.msra.mxu0 %v201
    %391 = vmatprep.subr.mxu0 %v210
    %392 = vmatpush1.msra.mxu0 %v209
    %393 = vmatprep.subr.mxu0 %v218
    %394 = vmatpush1.msra.mxu0 %v217
    %395 = vmatprep.subr.mxu0 0.0
    %396 = vmatpush1.msra.mxu0 0.0
    %397 = vmatprep.subr.mxu0 0.0
    %398 = vmatpush1.msra.mxu0 0.0
    %399 = vmatprep.subr.mxu0 0.0
    %400 = vmatpush1.msra.mxu0 0.0
    %401 = vmatprep.subr.mxu0 0.0
    %402 = vmatpush1.msra.mxu0 0.0
    %403 = vmatprep.subr.mxu0 0.0
    %404 = vmatpush1.msra.mxu0 0.0
    %405 = vmatprep.subr.mxu0 0.0
    %406 = vmatpush1.msra.mxu0 0.0
    %407 = vmatprep.subr.mxu0 0.0
    %408 = vmatpush1.msra.mxu0 0.0
    %409 = vmatprep.subr.mxu0 0.0
    %410 = vmatpush1.msra.mxu0 0.0
    %411 = vmatprep.subr.mxu0 0.0
    %412 = vmatpush1.msra.mxu0 0.0
    %413 = vmatprep.subr.mxu0 0.0
    %414 = vmatpush1.msra.mxu0 0.0
    %415 = vmatprep.subr.mxu0 0.0
    %416 = vmatpush1.msra.mxu0 0.0
    %417 = vmatprep.subr.mxu0 0.0
    %418 = vmatpush1.msra.mxu0 0.0
    %419 = vmatprep.subr.mxu0 0.0
    %420 = vmatpush1.msra.mxu0 0.0
    %421 = vmatprep.subr.mxu0 0.0
    %422 = vmatpush1.msra.mxu0 0.0
    %423 = vmatprep.subr.mxu0 0.0
    %424 = vmatpush1.msra.mxu0 0.0
    %425 = vmatprep.subr.mxu0 0.0
    %426 = vmatpush1.msra.mxu0 0.0
    %427 = vmatprep.mubr.f32.mxu0 0.0
    %428 = vmatmul.mubr.f32.gmra.mrb[0].mxu0 %v92
    %v429 = vpop.f32.mrb[0].mxu0
    %v430 = vadd.f32 0.0, %v429
    %v431 = vpop.f32.mrb[0].mxu0
    %v432 = vadd.f32 0.0, %v431
    %433 = vdwg.mxu0
    %434 = vmatprep.subr.mxu0 %v100
    %435 = vmatpush1.msra.mxu0 %v99
    %436 = vmatprep.subr.mxu0 %v108
    %437 = vmatpush1.msra.mxu0 %v107
    %438 = vmatprep.subr.mxu0 %v116
    %439 = vmatpush1.msra.mxu0 %v115
    %440 = vmatprep.subr.mxu0 %v124
    %441 = vmatpush1.msra.mxu0 %v123
    %442 = vmatprep.subr.mxu0 %v132
    %443 = vmatpush1.msra.mxu0 %v131
    %444 = vmatprep.subr.mxu0 %v140
    %445 = vmatpush1.msra.mxu0 %v139
    %446 = vmatprep.subr.mxu0 %v148
    %447 = vmatpush1.msra.mxu0 %v147
    %448 = vmatprep.subr.mxu0 %v156
    %449 = vmatpush1.msra.mxu0 %v155
    %450 = vmatprep.subr.mxu0 %v164
    %451 = vmatpush1.msra.mxu0 %v163
    %452 = vmatprep.subr.mxu0 %v172
    %453 = vmatpush1.msra.mxu0 %v171
    %454 = vmatprep.subr.mxu0 %v180
    %455 = vmatpush1.msra.mxu0 %v179
    %456 = vmatprep.subr.mxu0 %v188
    %457 = vmatpush1.msra.mxu0 %v187
    %458 = vmatprep.subr.mxu0 %v196
    %459 = vmatpush1.msra.mxu0 %v195
    %460 = vmatprep.subr.mxu0 %v204
    %461 = vmatpush1.msra.mxu0 %v203
    %462 = vmatprep.subr.mxu0 %v212
    %463 = vmatpush1.msra.mxu0 %v211
    %464 = vmatprep.subr.mxu0 %v220
    %465 = vmatpush1.msra.mxu0 %v219
    %466 = vmatprep.subr.mxu0 0.0
    %467 = vmatpush1.msra.mxu0 0.0
    %468 = vmatprep.subr.mxu0 0.0
    %469 = vmatpush1.msra.mxu0 0.0
    %470 = vmatprep.subr.mxu0 0.0
    %471 = vmatpush1.msra.mxu0 0.0
    %472 = vmatprep.subr.mxu0 0.0
    %473 = vmatpush1.msra.mxu0 0.0
    %474 = vmatprep.subr.mxu0 0.0
    %475 = vmatpush1.msra.mxu0 0.0
    %476 = vmatprep.subr.mxu0 0.0
    %477 = vmatpush1.msra.mxu0 0.0
    %478 = vmatprep.subr.mxu0 0.0
    %479 = vmatpush1.msra.mxu0 0.0
    %480 = vmatprep.subr.mxu0 0.0
    %481 = vmatpush1.msra.mxu0 0.0
    %482 = vmatprep.subr.mxu0 0.0
    %483 = vmatpush1.msra.mxu0 0.0
    %484 = vmatprep.subr.mxu0 0.0
    %485 = vmatpush1.msra.mxu0 0.0
    %486 = vmatprep.subr.mxu0 0.0
    %487 = vmatpush1.msra.mxu0 0.0
    %488 = vmatprep.subr.mxu0 0.0
    %489 = vmatpush1.msra.mxu0 0.0
    %490 = vmatprep.subr.mxu0 0.0
    %491 = vmatpush1.msra.mxu0 0.0
    %492 = vmatprep.subr.mxu0 0.0
    %493 = vmatpush1.msra.mxu0 0.0
    %494 = vmatprep.subr.mxu0 0.0
    %495 = vmatpush1.msra.mxu0 0.0
    %496 = vmatprep.subr.mxu0 0.0
    %497 = vmatpush1.msra.mxu0 0.0
    %498 = vmatprep.mubr.f32.mxu0 0.0
    %499 = vmatmul.mubr.f32.gmra.mrb[0].mxu0 %v92
    %v500 = vpop.f32.mrb[0].mxu0
    %v501 = vadd.f32 0.0, %v500
    %v502 = vpop.f32.mrb[0].mxu0
    %v503 = vadd.f32 0.0, %v502
    %504 = vdwg.mxu0
    %v505 = vadd.f32 %v84, %v288
    %v506 = vadd.f32 %v85, %v290
    %v507 = vadd.f32 %v86, %v359
    %v508 = vadd.f32 %v87, %v361
    %v509 = vadd.f32 %v88, %v430
    %v510 = vadd.f32 %v89, %v432
    %v511 = vadd.f32 %v90, %v501
    %v512 = vadd.f32 %v91, %v503
    %513 = vst [vmem:[#allocation2] sm:$0xff] %v505
    %514 = vst [vmem:[#allocation2 + $0x8] sm:$0xff] %v506
    %515 = vst [vmem:[#allocation2 + $0x10] sm:$0xff] %v507
    %516 = vst [vmem:[#allocation2 + $0x18] sm:$0xff] %v508
    %517 = vst [vmem:[#allocation2 + $0x20] sm:$0xff] %v509
    %518 = vst [vmem:[#allocation2 + $0x28] sm:$0xff] %v510
    %519 = vst [vmem:[#allocation2 + $0x30] sm:$0xff] %v511
    %520 = vst [vmem:[#allocation2 + $0x38] sm:$0xff] %v512
    // Predicated region
    $region42: #{tpu_custom_call.1} parent=1 // pred_check
      %p521 = pneg %p72
    $region43: #{tpu_custom_call.1} parent=1 // pred_check_branch
      %523 = sbr.rel (%p521) target = $region45
    $region44: #{tpu_custom_call.1} parent=1 // pred_region
      %v524 = vld [vmem:[#allocation2] sm:$0xff]
      %v525 = vld [vmem:[#allocation2 + $0x8] sm:$0xff]
      %v526 = vld [vmem:[#allocation2 + $0x10] sm:$0xff]
      %v527 = vld [vmem:[#allocation2 + $0x18] sm:$0xff]
      %v528 = vld [vmem:[#allocation2 + $0x20] sm:$0xff]
      %v529 = vld [vmem:[#allocation2 + $0x28] sm:$0xff]
      %v530 = vld [vmem:[#allocation2 + $0x30] sm:$0xff]
      %v531 = vld [vmem:[#allocation2 + $0x38] sm:$0xff]
      %v532 = vld [vmem:[#allocation8] sm:$0xff]
      %v534 = vlaneseq
      %v535 = vshrl.u32 %v534, 7
      %v536 = vsub.s32 0, %v535
      %v537 = vrot.slane %v532, %v536
      %v538 = vlaneseq
      %v539 = vshrl.u32 %v538, 7
      %v540 = vsub.s32 1, %v539
      %v541 = vrot.slane %v532, %v540
      %v542 = vlaneseq
      %v543 = vshrl.u32 %v542, 7
      %v544 = vsub.s32 2, %v543
      %v545 = vrot.slane %v532, %v544
      %v546 = vlaneseq
      %v547 = vshrl.u32 %v546, 7
      %v548 = vsub.s32 3, %v547
      %v549 = vrot.slane %v532, %v548
      %v550 = vlaneseq
      %v551 = vshrl.u32 %v550, 7
      %v552 = vsub.s32 4, %v551
      %v553 = vrot.slane %v532, %v552
      %v554 = vlaneseq
      %v555 = vshrl.u32 %v554, 7
      %v556 = vsub.s32 5, %v555
      %v557 = vrot.slane %v532, %v556
      %v558 = vlaneseq
      %v559 = vshrl.u32 %v558, 7
      %v560 = vsub.s32 6, %v559
      %v561 = vrot.slane %v532, %v560
      %v562 = vlaneseq
      %v563 = vshrl.u32 %v562, 7
      %v564 = vsub.s32 7, %v563
      %v565 = vrot.slane %v532, %v564
      %v574 = vadd.f32 %v524, %v537
      %v575 = vadd.f32 %v525, %v541
      %v576 = vadd.f32 %v526, %v545
      %v577 = vadd.f32 %v527, %v549
      %v578 = vadd.f32 %v528, %v553
      %v579 = vadd.f32 %v529, %v557
      %v580 = vadd.f32 %v530, %v561
      %v581 = vadd.f32 %v531, %v565
      %v582 = vmax.f32 %v574, 0.0
      %v583 = vmax.f32 %v575, 0.0
      %v584 = vmax.f32 %v576, 0.0
      %v585 = vmax.f32 %v577, 0.0
      %v586 = vmax.f32 %v578, 0.0
      %v587 = vmax.f32 %v579, 0.0
      %v588 = vmax.f32 %v580, 0.0
      %v589 = vmax.f32 %v581, 0.0
      %v590 = vld [vmem:[#allocation9] sm:$0xff]
      %v591 = vld [vmem:[#allocation9 + $0x8] sm:$0xff]
      %v592 = vld [vmem:[#allocation9 + $0x10] sm:$0xff]
      %v593 = vld [vmem:[#allocation9 + $0x18] sm:$0xff]
      %v594 = vld [vmem:[#allocation9 + $0x20] sm:$0xff]
      %v595 = vld [vmem:[#allocation9 + $0x28] sm:$0xff]
      %v596 = vld [vmem:[#allocation9 + $0x30] sm:$0xff]
      %v597 = vld [vmem:[#allocation9 + $0x38] sm:$0xff]
      %v598 = vld [vmem:[#allocation9 + $0x40] sm:$0xff]
      %v599 = vld [vmem:[#allocation9 + $0x48] sm:$0xff]
      %v600 = vld [vmem:[#allocation9 + $0x50] sm:$0xff]
      %v601 = vld [vmem:[#allocation9 + $0x58] sm:$0xff]
      %v602 = vld [vmem:[#allocation9 + $0x60] sm:$0xff]
      %v603 = vld [vmem:[#allocation9 + $0x68] sm:$0xff]
      %v604 = vld [vmem:[#allocation9 + $0x70] sm:$0xff]
      %v605 = vld [vmem:[#allocation9 + $0x78] sm:$0xff]
      %v606 = vld [vmem:[#allocation9 + $0x80] sm:$0xff]
      %v607 = vld [vmem:[#allocation9 + $0x88] sm:$0xff]
      %v608 = vld [vmem:[#allocation9 + $0x90] sm:$0xff]
      %v609 = vld [vmem:[#allocation9 + $0x98] sm:$0xff]
      %v610 = vld [vmem:[#allocation9 + $0xa0] sm:$0xff]
      %v611 = vld [vmem:[#allocation9 + $0xa8] sm:$0xff]
      %v612 = vld [vmem:[#allocation9 + $0xb0] sm:$0xff]
      %v613 = vld [vmem:[#allocation9 + $0xb8] sm:$0xff]
      %v614 = vld [vmem:[#allocation9 + $0xc0] sm:$0xff]
      %v615 = vld [vmem:[#allocation9 + $0xc8] sm:$0xff]
      %v616 = vld [vmem:[#allocation9 + $0xd0] sm:$0xff]
      %v617 = vld [vmem:[#allocation9 + $0xd8] sm:$0xff]
      %v618 = vld [vmem:[#allocation9 + $0xe0] sm:$0xff]
      %v619 = vld [vmem:[#allocation9 + $0xe8] sm:$0xff]
      %v620 = vld [vmem:[#allocation9 + $0xf0] sm:$0xff]
      %v621 = vld [vmem:[#allocation9 + $0xf8] sm:$0xff]
      %v622 = vld [vmem:[#allocation9 + $0x100] sm:$0xff]
      %v623 = vld [vmem:[#allocation9 + $0x108] sm:$0xff]
      %v624 = vld [vmem:[#allocation9 + $0x110] sm:$0xff]
      %v625 = vld [vmem:[#allocation9 + $0x118] sm:$0xff]
      %v626 = vld [vmem:[#allocation9 + $0x120] sm:$0xff]
      %v627 = vld [vmem:[#allocation9 + $0x128] sm:$0xff]
      %v628 = vld [vmem:[#allocation9 + $0x130] sm:$0xff]
      %v629 = vld [vmem:[#allocation9 + $0x138] sm:$0xff]
      %v630 = vld [vmem:[#allocation9 + $0x140] sm:$0xff]
      %v631 = vld [vmem:[#allocation9 + $0x148] sm:$0xff]
      %v632 = vld [vmem:[#allocation9 + $0x150] sm:$0xff]
      %v633 = vld [vmem:[#allocation9 + $0x158] sm:$0xff]
      %v634 = vld [vmem:[#allocation9 + $0x160] sm:$0xff]
      %v635 = vld [vmem:[#allocation9 + $0x168] sm:$0xff]
      %v636 = vld [vmem:[#allocation9 + $0x170] sm:$0xff]
      %v637 = vld [vmem:[#allocation9 + $0x178] sm:$0xff]
      %v638 = vld [vmem:[#allocation9 + $0x180] sm:$0xff]
      %v639 = vld [vmem:[#allocation9 + $0x188] sm:$0xff]
      %v640 = vld [vmem:[#allocation9 + $0x190] sm:$0xff]
      %v641 = vld [vmem:[#allocation9 + $0x198] sm:$0xff]
      %v642 = vld [vmem:[#allocation9 + $0x1a0] sm:$0xff]
      %v643 = vld [vmem:[#allocation9 + $0x1a8] sm:$0xff]
      %v644 = vld [vmem:[#allocation9 + $0x1b0] sm:$0xff]
      %v645 = vld [vmem:[#allocation9 + $0x1b8] sm:$0xff]
      %v646 = vld [vmem:[#allocation9 + $0x1c0] sm:$0xff]
      %v647 = vld [vmem:[#allocation9 + $0x1c8] sm:$0xff]
      %v648 = vld [vmem:[#allocation9 + $0x1d0] sm:$0xff]
      %v649 = vld [vmem:[#allocation9 + $0x1d8] sm:$0xff]
      %v650 = vld [vmem:[#allocation9 + $0x1e0] sm:$0xff]
      %v651 = vld [vmem:[#allocation9 + $0x1e8] sm:$0xff]
      %v652 = vld [vmem:[#allocation9 + $0x1f0] sm:$0xff]
      %v653 = vld [vmem:[#allocation9 + $0x1f8] sm:$0xff]
      %v654 = vld [vmem:[#allocation9 + $0x200] sm:$0xff]
      %v655 = vld [vmem:[#allocation9 + $0x208] sm:$0xff]
      %v656 = vld [vmem:[#allocation9 + $0x210] sm:$0xff]
      %v657 = vld [vmem:[#allocation9 + $0x218] sm:$0xff]
      %v658 = vld [vmem:[#allocation9 + $0x220] sm:$0xff]
      %v659 = vld [vmem:[#allocation9 + $0x228] sm:$0xff]
      %v660 = vld [vmem:[#allocation9 + $0x230] sm:$0xff]
      %v661 = vld [vmem:[#allocation9 + $0x238] sm:$0xff]
      %v662 = vld [vmem:[#allocation9 + $0x240] sm:$0xff]
      %v663 = vld [vmem:[#allocation9 + $0x248] sm:$0xff]
      %v664 = vld [vmem:[#allocation9 + $0x250] sm:$0xff]
      %v665 = vld [vmem:[#allocation9 + $0x258] sm:$0xff]
      %v666 = vld [vmem:[#allocation9 + $0x260] sm:$0xff]
      %v667 = vld [vmem:[#allocation9 + $0x268] sm:$0xff]
      %v668 = vld [vmem:[#allocation9 + $0x270] sm:$0xff]
      %v669 = vld [vmem:[#allocation9 + $0x278] sm:$0xff]
      %v670 = vld [vmem:[#allocation9 + $0x280] sm:$0xff]
      %v671 = vld [vmem:[#allocation9 + $0x288] sm:$0xff]
      %v672 = vld [vmem:[#allocation9 + $0x290] sm:$0xff]
      %v673 = vld [vmem:[#allocation9 + $0x298] sm:$0xff]
      %v674 = vld [vmem:[#allocation9 + $0x2a0] sm:$0xff]
      %v675 = vld [vmem:[#allocation9 + $0x2a8] sm:$0xff]
      %v676 = vld [vmem:[#allocation9 + $0x2b0] sm:$0xff]
      %v677 = vld [vmem:[#allocation9 + $0x2b8] sm:$0xff]
      %v678 = vld [vmem:[#allocation9 + $0x2c0] sm:$0xff]
      %v679 = vld [vmem:[#allocation9 + $0x2c8] sm:$0xff]
      %v680 = vld [vmem:[#allocation9 + $0x2d0] sm:$0xff]
      %v681 = vld [vmem:[#allocation9 + $0x2d8] sm:$0xff]
      %v682 = vld [vmem:[#allocation9 + $0x2e0] sm:$0xff]
      %v683 = vld [vmem:[#allocation9 + $0x2e8] sm:$0xff]
      %v684 = vld [vmem:[#allocation9 + $0x2f0] sm:$0xff]
      %v685 = vld [vmem:[#allocation9 + $0x2f8] sm:$0xff]
      %v686 = vld [vmem:[#allocation9 + $0x300] sm:$0xff]
      %v687 = vld [vmem:[#allocation9 + $0x308] sm:$0xff]
      %v688 = vld [vmem:[#allocation9 + $0x310] sm:$0xff]
      %v689 = vld [vmem:[#allocation9 + $0x318] sm:$0xff]
      %v690 = vld [vmem:[#allocation9 + $0x320] sm:$0xff]
      %v691 = vld [vmem:[#allocation9 + $0x328] sm:$0xff]
      %v692 = vld [vmem:[#allocation9 + $0x330] sm:$0xff]
      %v693 = vld [vmem:[#allocation9 + $0x338] sm:$0xff]
      %v694 = vld [vmem:[#allocation9 + $0x340] sm:$0xff]
      %v695 = vld [vmem:[#allocation9 + $0x348] sm:$0xff]
      %v696 = vld [vmem:[#allocation9 + $0x350] sm:$0xff]
      %v697 = vld [vmem:[#allocation9 + $0x358] sm:$0xff]
      %v698 = vld [vmem:[#allocation9 + $0x360] sm:$0xff]
      %v699 = vld [vmem:[#allocation9 + $0x368] sm:$0xff]
      %v700 = vld [vmem:[#allocation9 + $0x370] sm:$0xff]
      %v701 = vld [vmem:[#allocation9 + $0x378] sm:$0xff]
      %v702 = vld [vmem:[#allocation9 + $0x380] sm:$0xff]
      %v703 = vld [vmem:[#allocation9 + $0x388] sm:$0xff]
      %v704 = vld [vmem:[#allocation9 + $0x390] sm:$0xff]
      %v705 = vld [vmem:[#allocation9 + $0x398] sm:$0xff]
      %v706 = vld [vmem:[#allocation9 + $0x3a0] sm:$0xff]
      %v707 = vld [vmem:[#allocation9 + $0x3a8] sm:$0xff]
      %v708 = vld [vmem:[#allocation9 + $0x3b0] sm:$0xff]
      %v709 = vld [vmem:[#allocation9 + $0x3b8] sm:$0xff]
      %v710 = vld [vmem:[#allocation9 + $0x3c0] sm:$0xff]
      %v711 = vld [vmem:[#allocation9 + $0x3c8] sm:$0xff]
      %v712 = vld [vmem:[#allocation9 + $0x3d0] sm:$0xff]
      %v713 = vld [vmem:[#allocation9 + $0x3d8] sm:$0xff]
      %v714 = vld [vmem:[#allocation9 + $0x3e0] sm:$0xff]
      %v715 = vld [vmem:[#allocation9 + $0x3e8] sm:$0xff]
      %v716 = vld [vmem:[#allocation9 + $0x3f0] sm:$0xff]
      %v717 = vld [vmem:[#allocation9 + $0x3f8] sm:$0xff]
      %v718 = vld [vmem:[%s4] sm:$0x1]
      %v720 = vlaneseq
      %v721 = vshrl.u32 %v720, 7
      %v722 = vsub.s32 0, %v721
      %v723 = vrot.slane %v718, %v722
      %725 = vmatprep.subr.mxu0 0.0
      %726 = vmatpush1.msra.mxu0 %v590
      %727 = vmatprep.subr.mxu0 0.0
      %728 = vmatpush1.msra.mxu0 %v591
      %729 = vmatprep.subr.mxu0 0.0
      %730 = vmatpush1.msra.mxu0 %v592
      %731 = vmatprep.subr.mxu0 0.0
      %732 = vmatpush1.msra.mxu0 %v593
      %733 = vmatprep.subr.mxu0 0.0
      %734 = vmatpush1.msra.mxu0 %v594
      %735 = vmatprep.subr.mxu0 0.0
      %736 = vmatpush1.msra.mxu0 %v595
      %737 = vmatprep.subr.mxu0 0.0
      %738 = vmatpush1.msra.mxu0 %v596
      %739 = vmatprep.subr.mxu0 0.0
      %740 = vmatpush1.msra.mxu0 %v597
      %741 = vmatprep.subr.mxu0 0.0
      %742 = vmatpush1.msra.mxu0 %v598
      %743 = vmatprep.subr.mxu0 0.0
      %744 = vmatpush1.msra.mxu0 %v599
      %745 = vmatprep.subr.mxu0 0.0
      %746 = vmatpush1.msra.mxu0 %v600
      %747 = vmatprep.subr.mxu0 0.0
      %748 = vmatpush1.msra.mxu0 %v601
      %749 = vmatprep.subr.mxu0 0.0
      %750 = vmatpush1.msra.mxu0 %v602
      %751 = vmatprep.subr.mxu0 0.0
      %752 = vmatpush1.msra.mxu0 %v603
      %753 = vmatprep.subr.mxu0 0.0
      %754 = vmatpush1.msra.mxu0 %v604
      %755 = vmatprep.subr.mxu0 0.0
      %756 = vmatpush1.msra.mxu0 %v605
      %757 = vmatprep.subr.mxu0 0.0
      %758 = vmatpush1.msra.mxu0 %v606
      %759 = vmatprep.subr.mxu0 0.0
      %760 = vmatpush1.msra.mxu0 %v607
      %761 = vmatprep.subr.mxu0 0.0
      %762 = vmatpush1.msra.mxu0 %v608
      %763 = vmatprep.subr.mxu0 0.0
      %764 = vmatpush1.msra.mxu0 %v609
      %765 = vmatprep.subr.mxu0 0.0
      %766 = vmatpush1.msra.mxu0 %v610
      %767 = vmatprep.subr.mxu0 0.0
      %768 = vmatpush1.msra.mxu0 %v611
      %769 = vmatprep.subr.mxu0 0.0
      %770 = vmatpush1.msra.mxu0 %v612
      %771 = vmatprep.subr.mxu0 0.0
      %772 = vmatpush1.msra.mxu0 %v613
      %773 = vmatprep.subr.mxu0 0.0
      %774 = vmatpush1.msra.mxu0 %v614
      %775 = vmatprep.subr.mxu0 0.0
      %776 = vmatpush1.msra.mxu0 %v615
      %777 = vmatprep.subr.mxu0 0.0
      %778 = vmatpush1.msra.mxu0 %v616
      %779 = vmatprep.subr.mxu0 0.0
      %780 = vmatpush1.msra.mxu0 %v617
      %781 = vmatprep.subr.mxu0 0.0
      %782 = vmatpush1.msra.mxu0 %v618
      %783 = vmatprep.subr.mxu0 0.0
      %784 = vmatpush1.msra.mxu0 %v619
      %785 = vmatprep.subr.mxu0 0.0
      %786 = vmatpush1.msra.mxu0 %v620
      %787 = vmatprep.subr.mxu0 0.0
      %788 = vmatpush1.msra.mxu0 %v621
      %789 = vmatprep.mubr.f32.mxu0 %v583
      %790 = vmatmul.mubr.f32.gmra.mrb[0].mxu0 %v582
      %v791 = vpop.f32.mrb[0].mxu0
      %v792 = vadd.f32 %v723, %v791
      %v793 = vpop.f32.mrb[0].mxu0
      %794 = vdwg.mxu0
      %795 = vmatprep.subr.mxu0 0.0
      %796 = vmatpush1.msra.mxu0 %v622
      %797 = vmatprep.subr.mxu0 0.0
      %798 = vmatpush1.msra.mxu0 %v623
      %799 = vmatprep.subr.mxu0 0.0
      %800 = vmatpush1.msra.mxu0 %v624
      %801 = vmatprep.subr.mxu0 0.0
      %802 = vmatpush1.msra.mxu0 %v625
      %803 = vmatprep.subr.mxu0 0.0
      %804 = vmatpush1.msra.mxu0 %v626
      %805 = vmatprep.subr.mxu0 0.0
      %806 = vmatpush1.msra.mxu0 %v627
      %807 = vmatprep.subr.mxu0 0.0
      %808 = vmatpush1.msra.mxu0 %v628
      %809 = vmatprep.subr.mxu0 0.0
      %810 = vmatpush1.msra.mxu0 %v629
      %811 = vmatprep.subr.mxu0 0.0
      %812 = vmatpush1.msra.mxu0 %v630
      %813 = vmatprep.subr.mxu0 0.0
      %814 = vmatpush1.msra.mxu0 %v631
      %815 = vmatprep.subr.mxu0 0.0
      %816 = vmatpush1.msra.mxu0 %v632
      %817 = vmatprep.subr.mxu0 0.0
      %818 = vmatpush1.msra.mxu0 %v633
      %819 = vmatprep.subr.mxu0 0.0
      %820 = vmatpush1.msra.mxu0 %v634
      %821 = vmatprep.subr.mxu0 0.0
      %822 = vmatpush1.msra.mxu0 %v635
      %823 = vmatprep.subr.mxu0 0.0
      %824 = vmatpush1.msra.mxu0 %v636
      %825 = vmatprep.subr.mxu0 0.0
      %826 = vmatpush1.msra.mxu0 %v637
      %827 = vmatprep.subr.mxu0 0.0
      %828 = vmatpush1.msra.mxu0 %v638
      %829 = vmatprep.subr.mxu0 0.0
      %830 = vmatpush1.msra.mxu0 %v639
      %831 = vmatprep.subr.mxu0 0.0
      %832 = vmatpush1.msra.mxu0 %v640
      %833 = vmatprep.subr.mxu0 0.0
      %834 = vmatpush1.msra.mxu0 %v641
      %835 = vmatprep.subr.mxu0 0.0
      %836 = vmatpush1.msra.mxu0 %v642
      %837 = vmatprep.subr.mxu0 0.0
      %838 = vmatpush1.msra.mxu0 %v643
      %839 = vmatprep.subr.mxu0 0.0
      %840 = vmatpush1.msra.mxu0 %v644
      %841 = vmatprep.subr.mxu0 0.0
      %842 = vmatpush1.msra.mxu0 %v645
      %843 = vmatprep.subr.mxu0 0.0
      %844 = vmatpush1.msra.mxu0 %v646
      %845 = vmatprep.subr.mxu0 0.0
      %846 = vmatpush1.msra.mxu0 %v647
      %847 = vmatprep.subr.mxu0 0.0
      %848 = vmatpush1.msra.mxu0 %v648
      %849 = vmatprep.subr.mxu0 0.0
      %850 = vmatpush1.msra.mxu0 %v649
      %851 = vmatprep.subr.mxu0 0.0
      %852 = vmatpush1.msra.mxu0 %v650
      %853 = vmatprep.subr.mxu0 0.0
      %854 = vmatpush1.msra.mxu0 %v651
      %855 = vmatprep.subr.mxu0 0.0
      %856 = vmatpush1.msra.mxu0 %v652
      %857 = vmatprep.subr.mxu0 0.0
      %858 = vmatpush1.msra.mxu0 %v653
      %859 = vmatprep.mubr.f32.mxu0 %v585
      %860 = vmatmul.mubr.f32.gmra.mrb[0].mxu0 %v584
      %v861 = vpop.f32.mrb[0].mxu0
      %v862 = vadd.f32 %v792, %v861
      %v863 = vpop.f32.mrb[0].mxu0
      %864 = vdwg.mxu0
      %865 = vmatprep.subr.mxu0 0.0
      %866 = vmatpush1.msra.mxu0 %v654
      %867 = vmatprep.subr.mxu0 0.0
      %868 = vmatpush1.msra.mxu0 %v655
      %869 = vmatprep.subr.mxu0 0.0
      %870 = vmatpush1.msra.mxu0 %v656
      %871 = vmatprep.subr.mxu0 0.0
      %872 = vmatpush1.msra.mxu0 %v657
      %873 = vmatprep.subr.mxu0 0.0
      %874 = vmatpush1.msra.mxu0 %v658
      %875 = vmatprep.subr.mxu0 0.0
      %876 = vmatpush1.msra.mxu0 %v659
      %877 = vmatprep.subr.mxu0 0.0
      %878 = vmatpush1.msra.mxu0 %v660
      %879 = vmatprep.subr.mxu0 0.0
      %880 = vmatpush1.msra.mxu0 %v661
      %881 = vmatprep.subr.mxu0 0.0
      %882 = vmatpush1.msra.mxu0 %v662
      %883 = vmatprep.subr.mxu0 0.0
      %884 = vmatpush1.msra.mxu0 %v663
      %885 = vmatprep.subr.mxu0 0.0
      %886 = vmatpush1.msra.mxu0 %v664
      %887 = vmatprep.subr.mxu0 0.0
      %888 = vmatpush1.msra.mxu0 %v665
      %889 = vmatprep.subr.mxu0 0.0
      %890 = vmatpush1.msra.mxu0 %v666
      %891 = vmatprep.subr.mxu0 0.0
      %892 = vmatpush1.msra.mxu0 %v667
      %893 = vmatprep.subr.mxu0 0.0
      %894 = vmatpush1.msra.mxu0 %v668
      %895 = vmatprep.subr.mxu0 0.0
      %896 = vmatpush1.msra.mxu0 %v669
      %897 = vmatprep.subr.mxu0 0.0
      %898 = vmatpush1.msra.mxu0 %v670
      %899 = vmatprep.subr.mxu0 0.0
      %900 = vmatpush1.msra.mxu0 %v671
      %901 = vmatprep.subr.mxu0 0.0
      %902 = vmatpush1.msra.mxu0 %v672
      %903 = vmatprep.subr.mxu0 0.0
      %904 = vmatpush1.msra.mxu0 %v673
      %905 = vmatprep.subr.mxu0 0.0
      %906 = vmatpush1.msra.mxu0 %v674
      %907 = vmatprep.subr.mxu0 0.0
      %908 = vmatpush1.msra.mxu0 %v675
      %909 = vmatprep.subr.mxu0 0.0
      %910 = vmatpush1.msra.mxu0 %v676
      %911 = vmatprep.subr.mxu0 0.0
      %912 = vmatpush1.msra.mxu0 %v677
      %913 = vmatprep.subr.mxu0 0.0
      %914 = vmatpush1.msra.mxu0 %v678
      %915 = vmatprep.subr.mxu0 0.0
      %916 = vmatpush1.msra.mxu0 %v679
      %917 = vmatprep.subr.mxu0 0.0
      %918 = vmatpush1.msra.mxu0 %v680
      %919 = vmatprep.subr.mxu0 0.0
      %920 = vmatpush1.msra.mxu0 %v681
      %921 = vmatprep.subr.mxu0 0.0
      %922 = vmatpush1.msra.mxu0 %v682
      %923 = vmatprep.subr.mxu0 0.0
      %924 = vmatpush1.msra.mxu0 %v683
      %925 = vmatprep.subr.mxu0 0.0
      %926 = vmatpush1.msra.mxu0 %v684
      %927 = vmatprep.subr.mxu0 0.0
      %928 = vmatpush1.msra.mxu0 %v685
      %929 = vmatprep.mubr.f32.mxu0 %v587
      %930 = vmatmul.mubr.f32.gmra.mrb[0].mxu0 %v586
      %v931 = vpop.f32.mrb[0].mxu0
      %v932 = vadd.f32 %v862, %v931
      %v933 = vpop.f32.mrb[0].mxu0
      %934 = vdwg.mxu0
      %935 = vmatprep.subr.mxu0 0.0
      %936 = vmatpush1.msra.mxu0 %v686
      %937 = vmatprep.subr.mxu0 0.0
      %938 = vmatpush1.msra.mxu0 %v687
      %939 = vmatprep.subr.mxu0 0.0
      %940 = vmatpush1.msra.mxu0 %v688
      %941 = vmatprep.subr.mxu0 0.0
      %942 = vmatpush1.msra.mxu0 %v689
      %943 = vmatprep.subr.mxu0 0.0
      %944 = vmatpush1.msra.mxu0 %v690
      %945 = vmatprep.subr.mxu0 0.0
      %946 = vmatpush1.msra.mxu0 %v691
      %947 = vmatprep.subr.mxu0 0.0
      %948 = vmatpush1.msra.mxu0 %v692
      %949 = vmatprep.subr.mxu0 0.0
      %950 = vmatpush1.msra.mxu0 %v693
      %951 = vmatprep.subr.mxu0 0.0
      %952 = vmatpush1.msra.mxu0 %v694
      %953 = vmatprep.subr.mxu0 0.0
      %954 = vmatpush1.msra.mxu0 %v695
      %955 = vmatprep.subr.mxu0 0.0
      %956 = vmatpush1.msra.mxu0 %v696
      %957 = vmatprep.subr.mxu0 0.0
      %958 = vmatpush1.msra.mxu0 %v697
      %959 = vmatprep.subr.mxu0 0.0
      %960 = vmatpush1.msra.mxu0 %v698
      %961 = vmatprep.subr.mxu0 0.0
      %962 = vmatpush1.msra.mxu0 %v699
      %963 = vmatprep.subr.mxu0 0.0
      %964 = vmatpush1.msra.mxu0 %v700
      %965 = vmatprep.subr.mxu0 0.0
      %966 = vmatpush1.msra.mxu0 %v701
      %967 = vmatprep.subr.mxu0 0.0
      %968 = vmatpush1.msra.mxu0 %v702
      %969 = vmatprep.subr.mxu0 0.0
      %970 = vmatpush1.msra.mxu0 %v703
      %971 = vmatprep.subr.mxu0 0.0
      %972 = vmatpush1.msra.mxu0 %v704
      %973 = vmatprep.subr.mxu0 0.0
      %974 = vmatpush1.msra.mxu0 %v705
      %975 = vmatprep.subr.mxu0 0.0
      %976 = vmatpush1.msra.mxu0 %v706
      %977 = vmatprep.subr.mxu0 0.0
      %978 = vmatpush1.msra.mxu0 %v707
      %979 = vmatprep.subr.mxu0 0.0
      %980 = vmatpush1.msra.mxu0 %v708
      %981 = vmatprep.subr.mxu0 0.0
      %982 = vmatpush1.msra.mxu0 %v709
      %983 = vmatprep.subr.mxu0 0.0
      %984 = vmatpush1.msra.mxu0 %v710
      %985 = vmatprep.subr.mxu0 0.0
      %986 = vmatpush1.msra.mxu0 %v711
      %987 = vmatprep.subr.mxu0 0.0
      %988 = vmatpush1.msra.mxu0 %v712
      %989 = vmatprep.subr.mxu0 0.0
      %990 = vmatpush1.msra.mxu0 %v713
      %991 = vmatprep.subr.mxu0 0.0
      %992 = vmatpush1.msra.mxu0 %v714
      %993 = vmatprep.subr.mxu0 0.0
      %994 = vmatpush1.msra.mxu0 %v715
      %995 = vmatprep.subr.mxu0 0.0
      %996 = vmatpush1.msra.mxu0 %v716
      %997 = vmatprep.subr.mxu0 0.0
      %998 = vmatpush1.msra.mxu0 %v717
      %999 = vmatprep.mubr.f32.mxu0 %v589
      %1000 = vmatmul.mubr.f32.gmra.mrb[0].mxu0 %v588
      %v1001 = vpop.f32.mrb[0].mxu0
      %v1002 = vadd.f32 %v932, %v1001
      %v1003 = vpop.f32.mrb[0].mxu0
      %1004 = vdwg.mxu0
      %1005 = vst [vmem:[#allocation11] sm:$0xff] %v1002
    $region45: #{tpu_custom_call.1} parent=1 // pred_fallthru
      _
    // Predicated region
    $region46: #{tpu_custom_call.1} parent=1 // pred_check
      _
    $region47: #{tpu_custom_call.1} parent=1 // pred_check_branch
      %1007 = sbr.rel (0) target = $region49
    $region48: #{tpu_custom_call.1} parent=1 // pred_region
      %s1009 = ssub.s32 128, 128
      %1010 = vsyncadd [#allocation5], %s1009
      %s1012 = sshll.u32 [#allocation11], 4
      %s1013 = int_to_ptr.vmem [resolvable:$true] %s1012
      %1015 = dma.vmem_to_hbm [thread:$0]  %s1013, 128, %s5, [#allocation5]
    $region49: #{tpu_custom_call.1} parent=1 // pred_fallthru
      _
    // Predicated region
    $region50: #{tpu_custom_call.1} parent=1 // pred_check
      _
    $region51: #{tpu_custom_call.1} parent=1 // pred_check_branch
      %1017 = sbr.rel (0) target = $region53
    $region52: #{tpu_custom_call.1} parent=1 // pred_region
      %1018 = dma.done [#allocation5], 128
    $region53: #{tpu_custom_call.1} parent=1 // pred_fallthru
      _
    %1019 = vsyncpa [#allocation4], 1
    %1020 = vsyncpa [#allocation7], 1
    %1021 = vsyncpa [#allocation10], 1
    %1022 = vsyncpa [#allocation5], 1

</llo_original>
